<compile_context>
chip_gen: v6e
topology: v6e:2x2x1
jax: 0.10.0
libtpu: 0.0.40
codegen_flags: <defaults>
</compile_context>

<pallas_src>
import jax
import jax.numpy as jnp
from jax.experimental import pallas as pl
from jax.experimental.pallas import tpu as pltpu

DIM = 384
NUM_CLASSES = 257
LANE = 128
SUBLANE = 8


def _round_up(n, m):
    return ((n + m - 1) // m) * m


def _pad_axis(a, axis, target):
    pad = target - a.shape[axis]
    if pad == 0:
        return a
    widths = [(0, 0)] * a.ndim
    widths[axis] = (0, pad)
    return jnp.pad(a, widths)


def extract_patches_nchw(x, patch):
    """Glue: NCHW image -> (B, seq, C*patch*patch) token sequence."""
    B, C, H, W = x.shape
    hp, wp = H // patch, W // patch
    x = x.reshape(B, C, hp, patch, wp, patch)
    x = x.transpose(0, 2, 4, 1, 3, 5)              # (B, hp, wp, C, P, P)
    return x.reshape(B, hp * wp, C * patch * patch)


def vit_head_kernel(xp_ref, w_pe_ref, b_pe_ref, w_cls_ref, b_cls_ref, out_ref):
    """One grid step = one TB-row tile of the (seq-pooled) batch.

    xp_ref   : (TB, PD_PAD)   pooled patch vectors (mean over seq, hoisted)
    w_pe_ref : (PD_PAD, DIM)  encoder patch-embedding weight (zero-padded rows)
    b_pe_ref : (1, DIM)       f32
    w_cls_ref: (DIM, NC_PAD)  classifier weight (zero-padded class columns)
    b_cls_ref: (1, NC_PAD)    f32
    out_ref  : (TB, NC_PAD)   f32
    """
    # Pooled patch embedding: (TB, DIM), f32 accumulation on the MXU.
    emb = jnp.dot(xp_ref[...], w_pe_ref[...],
                  preferred_element_type=jnp.float32) + b_pe_ref[...]

    # Classifier head (nn.Linear(dim, num_classes)): lane-dense output store.
    logits = jnp.dot(emb.astype(w_cls_ref.dtype), w_cls_ref[...],
                     preferred_element_type=jnp.float32) + b_cls_ref[...]

    out_ref[...] = logits.astype(out_ref.dtype)


def vit_classifier(x_img, w_pe, b_pe, w_cls, b_cls, *, patch=8,
                   block_b=128, compute_dtype=jnp.float32):
    """x_img: (B, C, H, W) float NCHW -> logits (B, NUM_CLASSES).

    block_b: max batch rows per grid step (128 = MXU height; shrunk for small B).
    compute_dtype: matmul operand dtype (jnp.bfloat16 on v6e/v7x for speed);
                   accumulation is always f32.
    """
    B = x_img.shape[0]
    patch_dim, dim = w_pe.shape
    num_classes = w_cls.shape[1]

    # Encoder front end (glue): NCHW -> (B, seq, patch_dim) tokens.
    x_patches = extract_patches_nchw(x_img, patch)

    # Mean-hoist: valid because the encoder stub is a pure linear map.
    #   mean_seq(x @ W_pe + b_pe) == mean_seq(x) @ W_pe + b_pe
    # TODO(synk): remove this hoist once real transformer blocks are added.
    x_pooled = jnp.mean(x_patches, axis=1)                 # (B, patch_dim)

    # Lane/sublane-dense padding (zeros, sliced away below).
    pd_pad = _round_up(patch_dim, LANE)                    # e.g. 192 -> 256
    nc_pad = _round_up(num_classes, LANE)                  # 257 -> 384
    block_b = max(SUBLANE, min(block_b, _round_up(B, SUBLANE)))
    b_pad = _round_up(B, block_b)

    xp = _pad_axis(_pad_axis(x_pooled, 1, pd_pad), 0, b_pad).astype(compute_dtype)
    w_pe_p = _pad_axis(w_pe, 0, pd_pad).astype(compute_dtype)       # zero rows
    w_cls_p = _pad_axis(w_cls, 1, nc_pad).astype(compute_dtype)     # zero cols
    b_pe_p = b_pe.reshape(1, dim).astype(jnp.float32)
    b_cls_p = _pad_axis(b_cls.reshape(1, num_classes), 1, nc_pad).astype(jnp.float32)

    grid = (b_pad // block_b,)

    grid_spec = pltpu.PrefetchScalarGridSpec(
        num_scalar_prefetch=0,
        grid=grid,
        in_specs=[
            pl.BlockSpec((block_b, pd_pad), lambda i: (i, 0)),
            pl.BlockSpec((pd_pad, dim), lambda i: (0, 0)),
            pl.BlockSpec((1, dim), lambda i: (0, 0)),
            pl.BlockSpec((dim, nc_pad), lambda i: (0, 0)),
            pl.BlockSpec((1, nc_pad), lambda i: (0, 0)),
        ],
        out_specs=pl.BlockSpec((block_b, nc_pad), lambda i: (i, 0)),
    )

    logits_pad = pl.pallas_call(
        vit_head_kernel,
        out_shape=jax.ShapeDtypeStruct((b_pad, nc_pad), jnp.float32),
        grid_spec=grid_spec,
        compiler_params=pltpu.CompilerParams(
            dimension_semantics=("parallel",),
        ),
    )(xp, w_pe_p, b_pe_p, w_cls_p, b_cls_p)

    # Drop batch padding and the zero-padded class columns.
    return logits_pad[:B, :num_classes]


if __name__ == "__main__":
    key = jax.random.PRNGKey(0)
    k_x, k_wpe, k_bpe, k_wc, k_bc = jax.random.split(key, 5)

    # Small, forward-consistent shapes: batch=2, RGB 16x16 image, 8x8 patches
    # -> seq = 4 tokens, patch_dim = 3*8*8 = 192, dim = 384, classes = 257.
    B, C, H, W, P = 2, 3, 16, 16, 8
    patch_dim = C * P * P

    x_img = jax.random.normal(k_x, (B, C, H, W), dtype=jnp.float32)

    # Deterministic synthetic parameters (stored as (in, out) == W.T of nn.Linear).
    w_pe = jax.random.normal(k_wpe, (patch_dim, DIM), dtype=jnp.float32) * 0.02
    b_pe = jax.random.normal(k_bpe, (1, DIM), dtype=jnp.float32) * 0.02
    w_cls = jax.random.normal(k_wc, (DIM, NUM_CLASSES), dtype=jnp.float32) * 0.02
    b_cls = jax.random.normal(k_bc, (1, NUM_CLASSES), dtype=jnp.float32) * 0.02

    logits = vit_classifier(x_img, w_pe, b_pe, w_cls, b_cls, patch=P)
    logits = jax.block_until_ready(logits)

    # Pure-JAX reference with the PyTorch op order (embed -> mean -> linear).
    x_patches = extract_patches_nchw(x_img, P)               # (B, seq, patch_dim)
    emb_ref = x_patches @ w_pe + b_pe[None, ...]             # (B, seq, DIM)
    ref = emb_ref.mean(axis=1) @ w_cls + b_cls               # (B, NUM_CLASSES)

    assert logits.shape == (B, NUM_CLASSES)
    assert jnp.allclose(logits, ref, atol=1e-4, rtol=1e-4)

    print("KERNEL_OK")
</pallas_src>

<mosaic_0001>
module attributes {stable_mosaic.version = 11 : i64} {
  func.func @vit_head_kernel(%arg0: i32, %arg1: memref<8x256xf32, #tpu.memory_space<vmem>>, %arg2: memref<256x384xf32, #tpu.memory_space<vmem>>, %arg3: memref<1x384xf32, #tpu.memory_space<vmem>>, %arg4: memref<384x384xf32, #tpu.memory_space<vmem>>, %arg5: memref<1x384xf32, #tpu.memory_space<vmem>>, %arg6: memref<8x384xf32, #tpu.memory_space<vmem>>) attributes {dimension_semantics = [#tpu.dimension_semantics<parallel>], iteration_bounds = array<i64: 1>, scalar_prefetch = 0 : i64, scratch_operands = 0 : i64, tpu.core_type = #tpu.core_type<tc>, window_params = [{transform_indices = @transform_0, window_bounds = array<i64: 8, 256>}, {pipeline_mode = #tpu.pipeline_mode<synchronous>, transform_indices = @transform_1, window_bounds = array<i64: 256, 384>}, {pipeline_mode = #tpu.pipeline_mode<synchronous>, transform_indices = @transform_2, window_bounds = array<i64: 1, 384>}, {pipeline_mode = #tpu.pipeline_mode<synchronous>, transform_indices = @transform_3, window_bounds = array<i64: 384, 384>}, {pipeline_mode = #tpu.pipeline_mode<synchronous>, transform_indices = @transform_4, window_bounds = array<i64: 1, 384>}, {transform_indices = @transform_5, window_bounds = array<i64: 8, 384>}]} {
    %c0 = arith.constant 0 : index
    %c0_0 = arith.constant 0 : index
    %0 = vector.load %arg1[%c0, %c0_0] : memref<8x256xf32, #tpu.memory_space<vmem>>, vector<8x256xf32>
    %c0_1 = arith.constant 0 : index
    %c0_2 = arith.constant 0 : index
    %1 = vector.load %arg2[%c0_1, %c0_2] : memref<256x384xf32, #tpu.memory_space<vmem>>, vector<256x384xf32>
    %cst = arith.constant dense<0.000000e+00> : vector<8x384xf32>
    %2 = tpu.matmul %0, %1, %cst {dimension_numbers = #tpu.dot_dimension_numbers<[1], [0], [0], [1], [0, 0, 1, 1], [], []>} : vector<8x256xf32>, vector<256x384xf32>, vector<8x384xf32> -> vector<8x384xf32>
    %c0_3 = arith.constant 0 : index
    %c0_4 = arith.constant 0 : index
    %3 = vector.load %arg3[%c0_3, %c0_4] : memref<1x384xf32, #tpu.memory_space<vmem>>, vector<1x384xf32>
    %4 = vector.broadcast %3 : vector<1x384xf32> to vector<8x384xf32>
    %5 = arith.addf %2, %4 : vector<8x384xf32>
    %c0_5 = arith.constant 0 : index
    %c0_6 = arith.constant 0 : index
    %6 = vector.load %arg4[%c0_5, %c0_6] : memref<384x384xf32, #tpu.memory_space<vmem>>, vector<384x384xf32>
    %cst_7 = arith.constant dense<0.000000e+00> : vector<8x384xf32>
    %7 = tpu.matmul %5, %6, %cst_7 {dimension_numbers = #tpu.dot_dimension_numbers<[1], [0], [0], [1], [0, 0, 1, 1], [], []>} : vector<8x384xf32>, vector<384x384xf32>, vector<8x384xf32> -> vector<8x384xf32>
    %c0_8 = arith.constant 0 : index
    %c0_9 = arith.constant 0 : index
    %8 = vector.load %arg5[%c0_8, %c0_9] : memref<1x384xf32, #tpu.memory_space<vmem>>, vector<1x384xf32>
    %9 = vector.broadcast %8 : vector<1x384xf32> to vector<8x384xf32>
    %10 = arith.addf %7, %9 : vector<8x384xf32>
    %c0_10 = arith.constant 0 : index
    %c0_11 = arith.constant 0 : index
    %11 = vector.load %arg6[%c0_10, %c0_11] : memref<8x384xf32, #tpu.memory_space<vmem>>, vector<8x384xf32>
    tpu.vector_store %arg6[%c0_10, %c0_11], %10 {strides = array<i32>} : memref<8x384xf32, #tpu.memory_space<vmem>>, vector<8x384xf32>,
    return
  }
  func.func @transform_0(%arg0: i32) -> (i32, i32) {
    %c0_i32 = arith.constant 0 : i32
    %c0_i32_0 = arith.constant 0 : i32
    return %arg0, %c0_i32 : i32, i32
  }
  func.func @transform_1(%arg0: i32) -> (i32, i32) {
    %c0_i32 = arith.constant 0 : i32
    %c0_i32_0 = arith.constant 0 : i32
    %c0_i32_1 = arith.constant 0 : i32
    return %c0_i32, %c0_i32_0 : i32, i32
  }
  func.func @transform_2(%arg0: i32) -> (i32, i32) {
    %c0_i32 = arith.constant 0 : i32
    %c0_i32_0 = arith.constant 0 : i32
    %c0_i32_1 = arith.constant 0 : i32
    return %c0_i32, %c0_i32_0 : i32, i32
  }
  func.func @transform_3(%arg0: i32) -> (i32, i32) {
    %c0_i32 = arith.constant 0 : i32
    %c0_i32_0 = arith.constant 0 : i32
    %c0_i32_1 = arith.constant 0 : i32
    return %c0_i32, %c0_i32_0 : i32, i32
  }
  func.func @transform_4(%arg0: i32) -> (i32, i32) {
    %c0_i32 = arith.constant 0 : i32
    %c0_i32_0 = arith.constant 0 : i32
    %c0_i32_1 = arith.constant 0 : i32
    return %c0_i32, %c0_i32_0 : i32, i32
  }
  func.func @transform_5(%arg0: i32) -> (i32, i32) {
    %c0_i32 = arith.constant 0 : i32
    %c0_i32_0 = arith.constant 0 : i32
    return %arg0, %c0_i32 : i32, i32
  }
}

</mosaic_0001>

<llo_original>
// kernel: tpu_custom_call.1
$region0: #{tpu_custom_call.1}
  #allocation0 [shape = 'u32[]', space=smem, size = 0x4, offset = 0x4, fixed_abs, tag = 'smem constant byte address 0x4 - core index']
  #allocation1 [shape = 'u32[144,128]{1,0:T(1,128)}', space=vmem, size = 0x12000, scoped, tag = 'internal scratch']
  %s0 = inlined_call_operand.hbm [shape: f32[8,256], index: 0, kind: input, shape index: {}]
  %s1 = inlined_call_operand.hbm [shape: f32[256,384], index: 1, kind: input, shape index: {}]
  %s2 = inlined_call_operand.vmem [shape: f32[1,384], index: 2, kind: input, shape index: {}]
  %s3 = inlined_call_operand.hbm [shape: f32[384,384], index: 3, kind: input, shape index: {}]
  %s4 = inlined_call_operand.vmem [shape: f32[1,384], index: 4, kind: input, shape index: {}]
  %s5 = inlined_call_operand.hbm [shape: f32[8,384], index: 5, kind: output, shape index: {}]
  %s6 = sld [smem:[#allocation0]]
  $region42: #{tpu_custom_call.1} parent=0
    _
  %s8 = ssub.s32 1, %s6
  %s9 = scalar_select 0, %s8, %s6
  $region1: #{tpu_custom_call.1} parent=0
    #allocation2 [shape = 'u8[8192]{0}', space=vmem, size = 0x2000, scoped, tag = 'input window, operand 0, single buffered']
    #allocation3 [shape = 's32[1]{0}', space=sflag, size = 0x4, scoped, tag = 'scoped memory for tpu_custom_call.1']
    #allocation4 [shape = 's32[1]{0}', space=sflag, size = 0x4, scoped, tag = 'scoped memory for tpu_custom_call.1']
    #allocation5 [shape = 'u8[393216]{0}', space=vmem, size = 0x60000, scoped, tag = 'input window, operand 1, single buffered']
    #allocation6 [shape = 's32[1]{0}', space=sflag, size = 0x4, scoped, tag = 'scoped memory for tpu_custom_call.1']
    #allocation7 [shape = 'u8[589824]{0}', space=vmem, size = 0x90000, scoped, tag = 'input window, operand 3, single buffered']
    #allocation8 [shape = 'u8[12288]{0}', space=vmem, size = 0x3000, scoped, tag = 'output window, operand 0, single buffered']
    %10 = vsyncpa [#allocation3], 0
    %11 = vsyncpa [#allocation6], 0
    %12 = vsyncpa [#allocation4], 0
    // Predicated region
    $region2: #{tpu_custom_call.1} parent=1 // pred_check
      _
    $region3: #{tpu_custom_call.1} parent=1 // pred_check_branch
      %14 = sbr.rel (0) target = $region5
    $region4: #{tpu_custom_call.1} parent=1 // pred_region
      %s16 = ssub.s32 256, 256
      %17 = vsyncadd [#allocation3], %s16
      %s19 = sshll.u32 [#allocation2], 4
      %s20 = int_to_ptr.vmem [resolvable:$true] %s19
      %22 = dma.hbm_to_vmem [thread:$0]  %s0, 256, %s20, [#allocation3]
    $region5: #{tpu_custom_call.1} parent=1 // pred_fallthru
      _
    // Predicated region
    $region6: #{tpu_custom_call.1} parent=1 // pred_check
      _
    $region7: #{tpu_custom_call.1} parent=1 // pred_check_branch
      %24 = sbr.rel (0) target = $region9
    $region8: #{tpu_custom_call.1} parent=1 // pred_region
      %s26 = ssub.s32 12288, 12288
      %27 = vsyncadd [#allocation6], %s26
      %s28 = sshll.u32 [#allocation5], 4
      %s29 = int_to_ptr.vmem [resolvable:$true] %s28
      %34 = dma.hbm_to_vmem [thread:$0]  %s1, 12288, %s29, [#allocation6], 384, 384, 24
    $region9: #{tpu_custom_call.1} parent=1 // pred_fallthru
      _
    // Predicated region
    $region10: #{tpu_custom_call.1} parent=1 // pred_check
      _
    $region11: #{tpu_custom_call.1} parent=1 // pred_check_branch
      %36 = sbr.rel (0) target = $region13
    $region12: #{tpu_custom_call.1} parent=1 // pred_region
      _
    $region13: #{tpu_custom_call.1} parent=1 // pred_fallthru
      _
    // Predicated region
    $region14: #{tpu_custom_call.1} parent=1 // pred_check
      _
    $region15: #{tpu_custom_call.1} parent=1 // pred_check_branch
      %38 = sbr.rel (0) target = $region17
    $region16: #{tpu_custom_call.1} parent=1 // pred_region
      %s40 = ssub.s32 18432, 18432
      %41 = vsyncadd [#allocation6], %s40
      %s42 = sshll.u32 [#allocation7], 4
      %s43 = int_to_ptr.vmem [resolvable:$true] %s42
      %48 = dma.hbm_to_vmem [thread:$0]  %s3, 18432, %s43, [#allocation6], 384, 384, 24
    $region17: #{tpu_custom_call.1} parent=1 // pred_fallthru
      _
    // Predicated region
    $region18: #{tpu_custom_call.1} parent=1 // pred_check
      _
    $region19: #{tpu_custom_call.1} parent=1 // pred_check_branch
      %50 = sbr.rel (0) target = $region21
    $region20: #{tpu_custom_call.1} parent=1 // pred_region
      _
    $region21: #{tpu_custom_call.1} parent=1 // pred_fallthru
      _
    // Predicated region
    $region22: #{tpu_custom_call.1} parent=1 // pred_check
      _
    $region23: #{tpu_custom_call.1} parent=1 // pred_check_branch
      %52 = sbr.rel (0) target = $region25
    $region24: #{tpu_custom_call.1} parent=1 // pred_region
      %53 = dma.done [#allocation3], 256
    $region25: #{tpu_custom_call.1} parent=1 // pred_fallthru
      _
    // Predicated region
    $region26: #{tpu_custom_call.1} parent=1 // pred_check
      _
    $region27: #{tpu_custom_call.1} parent=1 // pred_check_branch
      %55 = sbr.rel (0) target = $region29
    $region28: #{tpu_custom_call.1} parent=1 // pred_region
      %56 = dma.done [#allocation6], 12288
    $region29: #{tpu_custom_call.1} parent=1 // pred_fallthru
      _
    // Predicated region
    $region30: #{tpu_custom_call.1} parent=1 // pred_check
      _
    $region31: #{tpu_custom_call.1} parent=1 // pred_check_branch
      %58 = sbr.rel (0) target = $region33
    $region32: #{tpu_custom_call.1} parent=1 // pred_region
      %59 = dma.done [#allocation6], 18432
    $region33: #{tpu_custom_call.1} parent=1 // pred_fallthru
      _
    %v60 = vld [vmem:[#allocation2] sm:$0xff]
    %v61 = vld [vmem:[#allocation2 + $0x8] sm:$0xff]
    %v62 = vld [vmem:[#allocation5] sm:$0xff]
    %v63 = vld [vmem:[#allocation5 + $0x8] sm:$0xff]
    %v64 = vld [vmem:[#allocation5 + $0x10] sm:$0xff]
    %v65 = vld [vmem:[#allocation5 + $0x18] sm:$0xff]
    %v66 = vld [vmem:[#allocation5 + $0x20] sm:$0xff]
    %v67 = vld [vmem:[#allocation5 + $0x28] sm:$0xff]
    %v68 = vld [vmem:[#allocation5 + $0x30] sm:$0xff]
    %v69 = vld [vmem:[#allocation5 + $0x38] sm:$0xff]
    %v70 = vld [vmem:[#allocation5 + $0x40] sm:$0xff]
    %v71 = vld [vmem:[#allocation5 + $0x48] sm:$0xff]
    %v72 = vld [vmem:[#allocation5 + $0x50] sm:$0xff]
    %v73 = vld [vmem:[#allocation5 + $0x58] sm:$0xff]
    %v74 = vld [vmem:[#allocation5 + $0x60] sm:$0xff]
    %v75 = vld [vmem:[#allocation5 + $0x68] sm:$0xff]
    %v76 = vld [vmem:[#allocation5 + $0x70] sm:$0xff]
    %v77 = vld [vmem:[#allocation5 + $0x78] sm:$0xff]
    %v78 = vld [vmem:[#allocation5 + $0x80] sm:$0xff]
    %v79 = vld [vmem:[#allocation5 + $0x88] sm:$0xff]
    %v80 = vld [vmem:[#allocation5 + $0x90] sm:$0xff]
    %v81 = vld [vmem:[#allocation5 + $0x98] sm:$0xff]
    %v82 = vld [vmem:[#allocation5 + $0xa0] sm:$0xff]
    %v83 = vld [vmem:[#allocation5 + $0xa8] sm:$0xff]
    %v84 = vld [vmem:[#allocation5 + $0xb0] sm:$0xff]
    %v85 = vld [vmem:[#allocation5 + $0xb8] sm:$0xff]
    %v86 = vld [vmem:[#allocation5 + $0xc0] sm:$0xff]
    %v87 = vld [vmem:[#allocation5 + $0xc8] sm:$0xff]
    %v88 = vld [vmem:[#allocation5 + $0xd0] sm:$0xff]
    %v89 = vld [vmem:[#allocation5 + $0xd8] sm:$0xff]
    %v90 = vld [vmem:[#allocation5 + $0xe0] sm:$0xff]
    %v91 = vld [vmem:[#allocation5 + $0xe8] sm:$0xff]
    %v92 = vld [vmem:[#allocation5 + $0xf0] sm:$0xff]
    %v93 = vld [vmem:[#allocation5 + $0xf8] sm:$0xff]
    %v94 = vld [vmem:[#allocation5 + $0x100] sm:$0xff]
    %v95 = vld [vmem:[#allocation5 + $0x108] sm:$0xff]
    %v96 = vld [vmem:[#allocation5 + $0x110] sm:$0xff]
    %v97 = vld [vmem:[#allocation5 + $0x118] sm:$0xff]
    %v98 = vld [vmem:[#allocation5 + $0x120] sm:$0xff]
    %v99 = vld [vmem:[#allocation5 + $0x128] sm:$0xff]
    %v100 = vld [vmem:[#allocation5 + $0x130] sm:$0xff]
    %v101 = vld [vmem:[#allocation5 + $0x138] sm:$0xff]
    %v102 = vld [vmem:[#allocation5 + $0x140] sm:$0xff]
    %v103 = vld [vmem:[#allocation5 + $0x148] sm:$0xff]
    %v104 = vld [vmem:[#allocation5 + $0x150] sm:$0xff]
    %v105 = vld [vmem:[#allocation5 + $0x158] sm:$0xff]
    %v106 = vld [vmem:[#allocation5 + $0x160] sm:$0xff]
    %v107 = vld [vmem:[#allocation5 + $0x168] sm:$0xff]
    %v108 = vld [vmem:[#allocation5 + $0x170] sm:$0xff]
    %v109 = vld [vmem:[#allocation5 + $0x178] sm:$0xff]
    %v110 = vld [vmem:[#allocation5 + $0x180] sm:$0xff]
    %v111 = vld [vmem:[#allocation5 + $0x188] sm:$0xff]
    %v112 = vld [vmem:[#allocation5 + $0x190] sm:$0xff]
    %v113 = vld [vmem:[#allocation5 + $0x198] sm:$0xff]
    %v114 = vld [vmem:[#allocation5 + $0x1a0] sm:$0xff]
    %v115 = vld [vmem:[#allocation5 + $0x1a8] sm:$0xff]
    %v116 = vld [vmem:[#allocation5 + $0x1b0] sm:$0xff]
    %v117 = vld [vmem:[#allocation5 + $0x1b8] sm:$0xff]
    %v118 = vld [vmem:[#allocation5 + $0x1c0] sm:$0xff]
    %v119 = vld [vmem:[#allocation5 + $0x1c8] sm:$0xff]
    %v120 = vld [vmem:[#allocation5 + $0x1d0] sm:$0xff]
    %v121 = vld [vmem:[#allocation5 + $0x1d8] sm:$0xff]
    %v122 = vld [vmem:[#allocation5 + $0x1e0] sm:$0xff]
    %v123 = vld [vmem:[#allocation5 + $0x1e8] sm:$0xff]
    %v124 = vld [vmem:[#allocation5 + $0x1f0] sm:$0xff]
    %v125 = vld [vmem:[#allocation5 + $0x1f8] sm:$0xff]
    %v126 = vld [vmem:[#allocation5 + $0x200] sm:$0xff]
    %v127 = vld [vmem:[#allocation5 + $0x208] sm:$0xff]
    %v128 = vld [vmem:[#allocation5 + $0x210] sm:$0xff]
    %v129 = vld [vmem:[#allocation5 + $0x218] sm:$0xff]
    %v130 = vld [vmem:[#allocation5 + $0x220] sm:$0xff]
    %v131 = vld [vmem:[#allocation5 + $0x228] sm:$0xff]
    %v132 = vld [vmem:[#allocation5 + $0x230] sm:$0xff]
    %v133 = vld [vmem:[#allocation5 + $0x238] sm:$0xff]
    %v134 = vld [vmem:[#allocation5 + $0x240] sm:$0xff]
    %v135 = vld [vmem:[#allocation5 + $0x248] sm:$0xff]
    %v136 = vld [vmem:[#allocation5 + $0x250] sm:$0xff]
    %v137 = vld [vmem:[#allocation5 + $0x258] sm:$0xff]
    %v138 = vld [vmem:[#allocation5 + $0x260] sm:$0xff]
    %v139 = vld [vmem:[#allocation5 + $0x268] sm:$0xff]
    %v140 = vld [vmem:[#allocation5 + $0x270] sm:$0xff]
    %v141 = vld [vmem:[#allocation5 + $0x278] sm:$0xff]
    %v142 = vld [vmem:[#allocation5 + $0x280] sm:$0xff]
    %v143 = vld [vmem:[#allocation5 + $0x288] sm:$0xff]
    %v144 = vld [vmem:[#allocation5 + $0x290] sm:$0xff]
    %v145 = vld [vmem:[#allocation5 + $0x298] sm:$0xff]
    %v146 = vld [vmem:[#allocation5 + $0x2a0] sm:$0xff]
    %v147 = vld [vmem:[#allocation5 + $0x2a8] sm:$0xff]
    %v148 = vld [vmem:[#allocation5 + $0x2b0] sm:$0xff]
    %v149 = vld [vmem:[#allocation5 + $0x2b8] sm:$0xff]
    %v150 = vld [vmem:[#allocation5 + $0x2c0] sm:$0xff]
    %v151 = vld [vmem:[#allocation5 + $0x2c8] sm:$0xff]
    %v152 = vld [vmem:[#allocation5 + $0x2d0] sm:$0xff]
    %v153 = vld [vmem:[#allocation5 + $0x2d8] sm:$0xff]
    %v154 = vld [vmem:[#allocation5 + $0x2e0] sm:$0xff]
    %v155 = vld [vmem:[#allocation5 + $0x2e8] sm:$0xff]
    %v156 = vld [vmem:[#allocation5 + $0x2f0] sm:$0xff]
    %v157 = vld [vmem:[#allocation5 + $0x2f8] sm:$0xff]
    %v158 = vld [vmem:[%s2] sm:$0x7]
    %v160 = vlaneseq
    %v161 = vshrl.u32 %v160, 7
    %v162 = vsub.s32 0, %v161
    %v163 = vrot.slane %v158, %v162
    %v164 = vlaneseq
    %v165 = vshrl.u32 %v164, 7
    %v166 = vsub.s32 1, %v165
    %v167 = vrot.slane %v158, %v166
    %v168 = vlaneseq
    %v169 = vshrl.u32 %v168, 7
    %v170 = vsub.s32 2, %v169
    %v171 = vrot.slane %v158, %v170
    %175 = vmatprep.subr.mxu0 %v108
    %176 = vmatpush1.msra.mxu0 %v107
    %177 = vmatprep.subr.mxu0 %v105
    %178 = vmatpush1.msra.mxu0 %v104
    %179 = vmatprep.subr.mxu0 %v102
    %180 = vmatpush1.msra.mxu0 %v101
    %181 = vmatprep.subr.mxu0 %v99
    %182 = vmatpush1.msra.mxu0 %v98
    %183 = vmatprep.subr.mxu0 %v96
    %184 = vmatpush1.msra.mxu0 %v95
    %185 = vmatprep.subr.mxu0 %v93
    %186 = vmatpush1.msra.mxu0 %v92
    %187 = vmatprep.subr.mxu0 %v90
    %188 = vmatpush1.msra.mxu0 %v89
    %189 = vmatprep.subr.mxu0 %v87
    %190 = vmatpush1.msra.mxu0 %v86
    %191 = vmatprep.subr.mxu0 %v84
    %192 = vmatpush1.msra.mxu0 %v83
    %193 = vmatprep.subr.mxu0 %v81
    %194 = vmatpush1.msra.mxu0 %v80
    %195 = vmatprep.subr.mxu0 %v78
    %196 = vmatpush1.msra.mxu0 %v77
    %197 = vmatprep.subr.mxu0 %v75
    %198 = vmatpush1.msra.mxu0 %v74
    %199 = vmatprep.subr.mxu0 %v72
    %200 = vmatpush1.msra.mxu0 %v71
    %201 = vmatprep.subr.mxu0 %v69
    %202 = vmatpush1.msra.mxu0 %v68
    %203 = vmatprep.subr.mxu0 %v66
    %204 = vmatpush1.msra.mxu0 %v65
    %205 = vmatprep.subr.mxu0 %v63
    %206 = vmatpush1.msra.mxu0 %v62
    %207 = vmatprep.subr.mxu0 %v156
    %208 = vmatpush2.msra.mxu0 %v155
    %209 = vmatprep.subr.mxu0 %v153
    %210 = vmatpush2.msra.mxu0 %v152
    %211 = vmatprep.subr.mxu0 %v150
    %212 = vmatpush2.msra.mxu0 %v149
    %213 = vmatprep.subr.mxu0 %v147
    %214 = vmatpush2.msra.mxu0 %v146
    %215 = vmatprep.subr.mxu0 %v144
    %216 = vmatpush2.msra.mxu0 %v143
    %217 = vmatprep.subr.mxu0 %v141
    %218 = vmatpush2.msra.mxu0 %v140
    %219 = vmatprep.subr.mxu0 %v138
    %220 = vmatpush2.msra.mxu0 %v137
    %221 = vmatprep.subr.mxu0 %v135
    %222 = vmatpush2.msra.mxu0 %v134
    %223 = vmatprep.subr.mxu0 %v132
    %224 = vmatpush2.msra.mxu0 %v131
    %225 = vmatprep.subr.mxu0 %v129
    %226 = vmatpush2.msra.mxu0 %v128
    %227 = vmatprep.subr.mxu0 %v126
    %228 = vmatpush2.msra.mxu0 %v125
    %229 = vmatprep.subr.mxu0 %v123
    %230 = vmatpush2.msra.mxu0 %v122
    %231 = vmatprep.subr.mxu0 %v120
    %232 = vmatpush2.msra.mxu0 %v119
    %233 = vmatprep.subr.mxu0 %v117
    %234 = vmatpush2.msra.mxu0 %v116
    %235 = vmatprep.subr.mxu0 %v114
    %236 = vmatpush2.msra.mxu0 %v113
    %237 = vmatprep.subr.mxu0 %v111
    %238 = vmatpush2.msra.mxu0 %v110
    %239 = vmatprep.mubr.f32.mxu0 %v61
    %240 = vmatmul.mubr.f32.gmra.mxu0 %v60
    %v241 = vpop.f32.mrf.mxu0
    %v242 = vadd.f32 %v163, %v241
    %v243 = vpop.f32.mrf.mxu0
    %v244 = vadd.f32 %v167, %v243
    %245 = vdwg.mxu0
    %246 = vmatprep.subr.mxu0 0.0
    %247 = vmatpush1.msra.mxu0 %v109
    %248 = vmatprep.subr.mxu0 0.0
    %249 = vmatpush1.msra.mxu0 %v106
    %250 = vmatprep.subr.mxu0 0.0
    %251 = vmatpush1.msra.mxu0 %v103
    %252 = vmatprep.subr.mxu0 0.0
    %253 = vmatpush1.msra.mxu0 %v100
    %254 = vmatprep.subr.mxu0 0.0
    %255 = vmatpush1.msra.mxu0 %v97
    %256 = vmatprep.subr.mxu0 0.0
    %257 = vmatpush1.msra.mxu0 %v94
    %258 = vmatprep.subr.mxu0 0.0
    %259 = vmatpush1.msra.mxu0 %v91
    %260 = vmatprep.subr.mxu0 0.0
    %261 = vmatpush1.msra.mxu0 %v88
    %262 = vmatprep.subr.mxu0 0.0
    %263 = vmatpush1.msra.mxu0 %v85
    %264 = vmatprep.subr.mxu0 0.0
    %265 = vmatpush1.msra.mxu0 %v82
    %266 = vmatprep.subr.mxu0 0.0
    %267 = vmatpush1.msra.mxu0 %v79
    %268 = vmatprep.subr.mxu0 0.0
    %269 = vmatpush1.msra.mxu0 %v76
    %270 = vmatprep.subr.mxu0 0.0
    %271 = vmatpush1.msra.mxu0 %v73
    %272 = vmatprep.subr.mxu0 0.0
    %273 = vmatpush1.msra.mxu0 %v70
    %274 = vmatprep.subr.mxu0 0.0
    %275 = vmatpush1.msra.mxu0 %v67
    %276 = vmatprep.subr.mxu0 0.0
    %277 = vmatpush1.msra.mxu0 %v64
    %278 = vmatprep.subr.mxu0 0.0
    %279 = vmatpush2.msra.mxu0 %v157
    %280 = vmatprep.subr.mxu0 0.0
    %281 = vmatpush2.msra.mxu0 %v154
    %282 = vmatprep.subr.mxu0 0.0
    %283 = vmatpush2.msra.mxu0 %v151
    %284 = vmatprep.subr.mxu0 0.0
    %285 = vmatpush2.msra.mxu0 %v148
    %286 = vmatprep.subr.mxu0 0.0
    %287 = vmatpush2.msra.mxu0 %v145
    %288 = vmatprep.subr.mxu0 0.0
    %289 = vmatpush2.msra.mxu0 %v142
    %290 = vmatprep.subr.mxu0 0.0
    %291 = vmatpush2.msra.mxu0 %v139
    %292 = vmatprep.subr.mxu0 0.0
    %293 = vmatpush2.msra.mxu0 %v136
    %294 = vmatprep.subr.mxu0 0.0
    %295 = vmatpush2.msra.mxu0 %v133
    %296 = vmatprep.subr.mxu0 0.0
    %297 = vmatpush2.msra.mxu0 %v130
    %298 = vmatprep.subr.mxu0 0.0
    %299 = vmatpush2.msra.mxu0 %v127
    %300 = vmatprep.subr.mxu0 0.0
    %301 = vmatpush2.msra.mxu0 %v124
    %302 = vmatprep.subr.mxu0 0.0
    %303 = vmatpush2.msra.mxu0 %v121
    %304 = vmatprep.subr.mxu0 0.0
    %305 = vmatpush2.msra.mxu0 %v118
    %306 = vmatprep.subr.mxu0 0.0
    %307 = vmatpush2.msra.mxu0 %v115
    %308 = vmatprep.subr.mxu0 0.0
    %309 = vmatpush2.msra.mxu0 %v112
    %310 = vmatprep.mubr.f32.mxu0 %v61
    %311 = vmatmul.mubr.f32.gmra.mxu0 %v60
    %v312 = vpop.f32.mrf.mxu0
    %v313 = vadd.f32 %v171, %v312
    %v314 = vpop.f32.mrf.mxu0
    %315 = vdwg.mxu0
    %v316 = vld [vmem:[#allocation7] sm:$0xff]
    %v317 = vld [vmem:[#allocation7 + $0x8] sm:$0xff]
    %v318 = vld [vmem:[#allocation7 + $0x10] sm:$0xff]
    %v319 = vld [vmem:[#allocation7 + $0x18] sm:$0xff]
    %v320 = vld [vmem:[#allocation7 + $0x20] sm:$0xff]
    %v321 = vld [vmem:[#allocation7 + $0x28] sm:$0xff]
    %v322 = vld [vmem:[#allocation7 + $0x30] sm:$0xff]
    %v323 = vld [vmem:[#allocation7 + $0x38] sm:$0xff]
    %v324 = vld [vmem:[#allocation7 + $0x40] sm:$0xff]
    %v325 = vld [vmem:[#allocation7 + $0x48] sm:$0xff]
    %v326 = vld [vmem:[#allocation7 + $0x50] sm:$0xff]
    %v327 = vld [vmem:[#allocation7 + $0x58] sm:$0xff]
    %v328 = vld [vmem:[#allocation7 + $0x60] sm:$0xff]
    %v329 = vld [vmem:[#allocation7 + $0x68] sm:$0xff]
    %v330 = vld [vmem:[#allocation7 + $0x70] sm:$0xff]
    %v331 = vld [vmem:[#allocation7 + $0x78] sm:$0xff]
    %v332 = vld [vmem:[#allocation7 + $0x80] sm:$0xff]
    %v333 = vld [vmem:[#allocation7 + $0x88] sm:$0xff]
    %v334 = vld [vmem:[#allocation7 + $0x90] sm:$0xff]
    %v335 = vld [vmem:[#allocation7 + $0x98] sm:$0xff]
    %v336 = vld [vmem:[#allocation7 + $0xa0] sm:$0xff]
    %v337 = vld [vmem:[#allocation7 + $0xa8] sm:$0xff]
    %v338 = vld [vmem:[#allocation7 + $0xb0] sm:$0xff]
    %v339 = vld [vmem:[#allocation7 + $0xb8] sm:$0xff]
    %v340 = vld [vmem:[#allocation7 + $0xc0] sm:$0xff]
    %v341 = vld [vmem:[#allocation7 + $0xc8] sm:$0xff]
    %v342 = vld [vmem:[#allocation7 + $0xd0] sm:$0xff]
    %v343 = vld [vmem:[#allocation7 + $0xd8] sm:$0xff]
    %v344 = vld [vmem:[#allocation7 + $0xe0] sm:$0xff]
    %v345 = vld [vmem:[#allocation7 + $0xe8] sm:$0xff]
    %v346 = vld [vmem:[#allocation7 + $0xf0] sm:$0xff]
    %v347 = vld [vmem:[#allocation7 + $0xf8] sm:$0xff]
    %v348 = vld [vmem:[#allocation7 + $0x100] sm:$0xff]
    %v349 = vld [vmem:[#allocation7 + $0x108] sm:$0xff]
    %v350 = vld [vmem:[#allocation7 + $0x110] sm:$0xff]
    %v351 = vld [vmem:[#allocation7 + $0x118] sm:$0xff]
    %v352 = vld [vmem:[#allocation7 + $0x120] sm:$0xff]
    %v353 = vld [vmem:[#allocation7 + $0x128] sm:$0xff]
    %v354 = vld [vmem:[#allocation7 + $0x130] sm:$0xff]
    %v355 = vld [vmem:[#allocation7 + $0x138] sm:$0xff]
    %v356 = vld [vmem:[#allocation7 + $0x140] sm:$0xff]
    %v357 = vld [vmem:[#allocation7 + $0x148] sm:$0xff]
    %v358 = vld [vmem:[#allocation7 + $0x150] sm:$0xff]
    %v359 = vld [vmem:[#allocation7 + $0x158] sm:$0xff]
    %v360 = vld [vmem:[#allocation7 + $0x160] sm:$0xff]
    %v361 = vld [vmem:[#allocation7 + $0x168] sm:$0xff]
    %v362 = vld [vmem:[#allocation7 + $0x170] sm:$0xff]
    %v363 = vld [vmem:[#allocation7 + $0x178] sm:$0xff]
    %v364 = vld [vmem:[#allocation7 + $0x180] sm:$0xff]
    %v365 = vld [vmem:[#allocation7 + $0x188] sm:$0xff]
    %v366 = vld [vmem:[#allocation7 + $0x190] sm:$0xff]
    %v367 = vld [vmem:[#allocation7 + $0x198] sm:$0xff]
    %v368 = vld [vmem:[#allocation7 + $0x1a0] sm:$0xff]
    %v369 = vld [vmem:[#allocation7 + $0x1a8] sm:$0xff]
    %v370 = vld [vmem:[#allocation7 + $0x1b0] sm:$0xff]
    %v371 = vld [vmem:[#allocation7 + $0x1b8] sm:$0xff]
    %v372 = vld [vmem:[#allocation7 + $0x1c0] sm:$0xff]
    %v373 = vld [vmem:[#allocation7 + $0x1c8] sm:$0xff]
    %v374 = vld [vmem:[#allocation7 + $0x1d0] sm:$0xff]
    %v375 = vld [vmem:[#allocation7 + $0x1d8] sm:$0xff]
    %v376 = vld [vmem:[#allocation7 + $0x1e0] sm:$0xff]
    %v377 = vld [vmem:[#allocation7 + $0x1e8] sm:$0xff]
    %v378 = vld [vmem:[#allocation7 + $0x1f0] sm:$0xff]
    %v379 = vld [vmem:[#allocation7 + $0x1f8] sm:$0xff]
    %v380 = vld [vmem:[#allocation7 + $0x200] sm:$0xff]
    %v381 = vld [vmem:[#allocation7 + $0x208] sm:$0xff]
    %v382 = vld [vmem:[#allocation7 + $0x210] sm:$0xff]
    %v383 = vld [vmem:[#allocation7 + $0x218] sm:$0xff]
    %v384 = vld [vmem:[#allocation7 + $0x220] sm:$0xff]
    %v385 = vld [vmem:[#allocation7 + $0x228] sm:$0xff]
    %v386 = vld [vmem:[#allocation7 + $0x230] sm:$0xff]
    %v387 = vld [vmem:[#allocation7 + $0x238] sm:$0xff]
    %v388 = vld [vmem:[#allocation7 + $0x240] sm:$0xff]
    %v389 = vld [vmem:[#allocation7 + $0x248] sm:$0xff]
    %v390 = vld [vmem:[#allocation7 + $0x250] sm:$0xff]
    %v391 = vld [vmem:[#allocation7 + $0x258] sm:$0xff]
    %v392 = vld [vmem:[#allocation7 + $0x260] sm:$0xff]
    %v393 = vld [vmem:[#allocation7 + $0x268] sm:$0xff]
    %v394 = vld [vmem:[#allocation7 + $0x270] sm:$0xff]
    %v395 = vld [vmem:[#allocation7 + $0x278] sm:$0xff]
    %v396 = vld [vmem:[#allocation7 + $0x280] sm:$0xff]
    %v397 = vld [vmem:[#allocation7 + $0x288] sm:$0xff]
    %v398 = vld [vmem:[#allocation7 + $0x290] sm:$0xff]
    %v399 = vld [vmem:[#allocation7 + $0x298] sm:$0xff]
    %v400 = vld [vmem:[#allocation7 + $0x2a0] sm:$0xff]
    %v401 = vld [vmem:[#allocation7 + $0x2a8] sm:$0xff]
    %v402 = vld [vmem:[#allocation7 + $0x2b0] sm:$0xff]
    %v403 = vld [vmem:[#allocation7 + $0x2b8] sm:$0xff]
    %v404 = vld [vmem:[#allocation7 + $0x2c0] sm:$0xff]
    %v405 = vld [vmem:[#allocation7 + $0x2c8] sm:$0xff]
    %v406 = vld [vmem:[#allocation7 + $0x2d0] sm:$0xff]
    %v407 = vld [vmem:[#allocation7 + $0x2d8] sm:$0xff]
    %v408 = vld [vmem:[#allocation7 + $0x2e0] sm:$0xff]
    %v409 = vld [vmem:[#allocation7 + $0x2e8] sm:$0xff]
    %v410 = vld [vmem:[#allocation7 + $0x2f0] sm:$0xff]
    %v411 = vld [vmem:[#allocation7 + $0x2f8] sm:$0xff]
    %v412 = vld [vmem:[#allocation7 + $0x300] sm:$0xff]
    %v413 = vld [vmem:[#allocation7 + $0x308] sm:$0xff]
    %v414 = vld [vmem:[#allocation7 + $0x310] sm:$0xff]
    %v415 = vld [vmem:[#allocation7 + $0x318] sm:$0xff]
    %v416 = vld [vmem:[#allocation7 + $0x320] sm:$0xff]
    %v417 = vld [vmem:[#allocation7 + $0x328] sm:$0xff]
    %v418 = vld [vmem:[#allocation7 + $0x330] sm:$0xff]
    %v419 = vld [vmem:[#allocation7 + $0x338] sm:$0xff]
    %v420 = vld [vmem:[#allocation7 + $0x340] sm:$0xff]
    %v421 = vld [vmem:[#allocation7 + $0x348] sm:$0xff]
    %v422 = vld [vmem:[#allocation7 + $0x350] sm:$0xff]
    %v423 = vld [vmem:[#allocation7 + $0x358] sm:$0xff]
    %v424 = vld [vmem:[#allocation7 + $0x360] sm:$0xff]
    %v425 = vld [vmem:[#allocation7 + $0x368] sm:$0xff]
    %v426 = vld [vmem:[#allocation7 + $0x370] sm:$0xff]
    %v427 = vld [vmem:[#allocation7 + $0x378] sm:$0xff]
    %v428 = vld [vmem:[#allocation7 + $0x380] sm:$0xff]
    %v429 = vld [vmem:[#allocation7 + $0x388] sm:$0xff]
    %v430 = vld [vmem:[#allocation7 + $0x390] sm:$0xff]
    %v431 = vld [vmem:[#allocation7 + $0x398] sm:$0xff]
    %v432 = vld [vmem:[#allocation7 + $0x3a0] sm:$0xff]
    %v433 = vld [vmem:[#allocation7 + $0x3a8] sm:$0xff]
    %v434 = vld [vmem:[#allocation7 + $0x3b0] sm:$0xff]
    %v435 = vld [vmem:[#allocation7 + $0x3b8] sm:$0xff]
    %v436 = vld [vmem:[#allocation7 + $0x3c0] sm:$0xff]
    %v437 = vld [vmem:[#allocation7 + $0x3c8] sm:$0xff]
    %v438 = vld [vmem:[#allocation7 + $0x3d0] sm:$0xff]
    %v439 = vld [vmem:[#allocation7 + $0x3d8] sm:$0xff]
    %v440 = vld [vmem:[#allocation7 + $0x3e0] sm:$0xff]
    %v441 = vld [vmem:[#allocation7 + $0x3e8] sm:$0xff]
    %v442 = vld [vmem:[#allocation7 + $0x3f0] sm:$0xff]
    %v443 = vld [vmem:[#allocation7 + $0x3f8] sm:$0xff]
    %v444 = vld [vmem:[#allocation7 + $0x400] sm:$0xff]
    %v445 = vld [vmem:[#allocation7 + $0x408] sm:$0xff]
    %v446 = vld [vmem:[#allocation7 + $0x410] sm:$0xff]
    %v447 = vld [vmem:[#allocation7 + $0x418] sm:$0xff]
    %v448 = vld [vmem:[#allocation7 + $0x420] sm:$0xff]
    %v449 = vld [vmem:[#allocation7 + $0x428] sm:$0xff]
    %v450 = vld [vmem:[#allocation7 + $0x430] sm:$0xff]
    %v451 = vld [vmem:[#allocation7 + $0x438] sm:$0xff]
    %v452 = vld [vmem:[#allocation7 + $0x440] sm:$0xff]
    %v453 = vld [vmem:[#allocation7 + $0x448] sm:$0xff]
    %v454 = vld [vmem:[#allocation7 + $0x450] sm:$0xff]
    %v455 = vld [vmem:[#allocation7 + $0x458] sm:$0xff]
    %v456 = vld [vmem:[#allocation7 + $0x460] sm:$0xff]
    %v457 = vld [vmem:[#allocation7 + $0x468] sm:$0xff]
    %v458 = vld [vmem:[#allocation7 + $0x470] sm:$0xff]
    %v459 = vld [vmem:[#allocation7 + $0x478] sm:$0xff]
    %v460 = vld [vmem:[%s4] sm:$0x7]
    %v462 = vlaneseq
    %v463 = vshrl.u32 %v462, 7
    %v464 = vsub.s32 0, %v463
    %v465 = vrot.slane %v460, %v464
    %v466 = vlaneseq
    %v467 = vshrl.u32 %v466, 7
    %v468 = vsub.s32 1, %v467
    %v469 = vrot.slane %v460, %v468
    %v470 = vlaneseq
    %v471 = vshrl.u32 %v470, 7
    %v472 = vsub.s32 2, %v471
    %v473 = vrot.slane %v460, %v472
    %477 = vmatprep.subr.mxu0 %v362
    %478 = vmatpush1.msra.mxu0 %v361
    %479 = vmatprep.subr.mxu0 %v359
    %480 = vmatpush1.msra.mxu0 %v358
    %481 = vmatprep.subr.mxu0 %v356
    %482 = vmatpush1.msra.mxu0 %v355
    %483 = vmatprep.subr.mxu0 %v353
    %484 = vmatpush1.msra.mxu0 %v352
    %485 = vmatprep.subr.mxu0 %v350
    %486 = vmatpush1.msra.mxu0 %v349
    %487 = vmatprep.subr.mxu0 %v347
    %488 = vmatpush1.msra.mxu0 %v346
    %489 = vmatprep.subr.mxu0 %v344
    %490 = vmatpush1.msra.mxu0 %v343
    %491 = vmatprep.subr.mxu0 %v341
    %492 = vmatpush1.msra.mxu0 %v340
    %493 = vmatprep.subr.mxu0 %v338
    %494 = vmatpush1.msra.mxu0 %v337
    %495 = vmatprep.subr.mxu0 %v335
    %496 = vmatpush1.msra.mxu0 %v334
    %497 = vmatprep.subr.mxu0 %v332
    %498 = vmatpush1.msra.mxu0 %v331
    %499 = vmatprep.subr.mxu0 %v329
    %500 = vmatpush1.msra.mxu0 %v328
    %501 = vmatprep.subr.mxu0 %v326
    %502 = vmatpush1.msra.mxu0 %v325
    %503 = vmatprep.subr.mxu0 %v323
    %504 = vmatpush1.msra.mxu0 %v322
    %505 = vmatprep.subr.mxu0 %v320
    %506 = vmatpush1.msra.mxu0 %v319
    %507 = vmatprep.subr.mxu0 %v317
    %508 = vmatpush1.msra.mxu0 %v316
    %509 = vmatprep.subr.mxu0 %v410
    %510 = vmatpush2.msra.mxu0 %v409
    %511 = vmatprep.subr.mxu0 %v407
    %512 = vmatpush2.msra.mxu0 %v406
    %513 = vmatprep.subr.mxu0 %v404
    %514 = vmatpush2.msra.mxu0 %v403
    %515 = vmatprep.subr.mxu0 %v401
    %516 = vmatpush2.msra.mxu0 %v400
    %517 = vmatprep.subr.mxu0 %v398
    %518 = vmatpush2.msra.mxu0 %v397
    %519 = vmatprep.subr.mxu0 %v395
    %520 = vmatpush2.msra.mxu0 %v394
    %521 = vmatprep.subr.mxu0 %v392
    %522 = vmatpush2.msra.mxu0 %v391
    %523 = vmatprep.subr.mxu0 %v389
    %524 = vmatpush2.msra.mxu0 %v388
    %525 = vmatprep.subr.mxu0 %v386
    %526 = vmatpush2.msra.mxu0 %v385
    %527 = vmatprep.subr.mxu0 %v383
    %528 = vmatpush2.msra.mxu0 %v382
    %529 = vmatprep.subr.mxu0 %v380
    %530 = vmatpush2.msra.mxu0 %v379
    %531 = vmatprep.subr.mxu0 %v377
    %532 = vmatpush2.msra.mxu0 %v376
    %533 = vmatprep.subr.mxu0 %v374
    %534 = vmatpush2.msra.mxu0 %v373
    %535 = vmatprep.subr.mxu0 %v371
    %536 = vmatpush2.msra.mxu0 %v370
    %537 = vmatprep.subr.mxu0 %v368
    %538 = vmatpush2.msra.mxu0 %v367
    %539 = vmatprep.subr.mxu0 %v365
    %540 = vmatpush2.msra.mxu0 %v364
    %541 = vmatprep.mubr.f32.mxu0 %v244
    %542 = vmatmul.mubr.f32.gmra.mxu0 %v242
    %v543 = vpop.f32.mrf.mxu0
    %v544 = vadd.f32 %v465, %v543
    %v545 = vpop.f32.mrf.mxu0
    %v546 = vadd.f32 %v469, %v545
    %547 = vdwg.mxu0
    %548 = vmatprep.subr.mxu0 %v458
    %549 = vmatpush1.msra.mxu0 %v457
    %550 = vmatprep.subr.mxu0 %v455
    %551 = vmatpush1.msra.mxu0 %v454
    %552 = vmatprep.subr.mxu0 %v452
    %553 = vmatpush1.msra.mxu0 %v451
    %554 = vmatprep.subr.mxu0 %v449
    %555 = vmatpush1.msra.mxu0 %v448
    %556 = vmatprep.subr.mxu0 %v446
    %557 = vmatpush1.msra.mxu0 %v445
    %558 = vmatprep.subr.mxu0 %v443
    %559 = vmatpush1.msra.mxu0 %v442
    %560 = vmatprep.subr.mxu0 %v440
    %561 = vmatpush1.msra.mxu0 %v439
    %562 = vmatprep.subr.mxu0 %v437
    %563 = vmatpush1.msra.mxu0 %v436
    %564 = vmatprep.subr.mxu0 %v434
    %565 = vmatpush1.msra.mxu0 %v433
    %566 = vmatprep.subr.mxu0 %v431
    %567 = vmatpush1.msra.mxu0 %v430
    %568 = vmatprep.subr.mxu0 %v428
    %569 = vmatpush1.msra.mxu0 %v427
    %570 = vmatprep.subr.mxu0 %v425
    %571 = vmatpush1.msra.mxu0 %v424
    %572 = vmatprep.subr.mxu0 %v422
    %573 = vmatpush1.msra.mxu0 %v421
    %574 = vmatprep.subr.mxu0 %v419
    %575 = vmatpush1.msra.mxu0 %v418
    %576 = vmatprep.subr.mxu0 %v416
    %577 = vmatpush1.msra.mxu0 %v415
    %578 = vmatprep.subr.mxu0 %v413
    %579 = vmatpush1.msra.mxu0 %v412
    %580 = vmatprep.subr.mxu0 0.0
    %581 = vmatpush2.msra.mxu0 0.0
    %582 = vmatprep.subr.mxu0 0.0
    %583 = vmatpush2.msra.mxu0 0.0
    %584 = vmatprep.subr.mxu0 0.0
    %585 = vmatpush2.msra.mxu0 0.0
    %586 = vmatprep.subr.mxu0 0.0
    %587 = vmatpush2.msra.mxu0 0.0
    %588 = vmatprep.subr.mxu0 0.0
    %589 = vmatpush2.msra.mxu0 0.0
    %590 = vmatprep.subr.mxu0 0.0
    %591 = vmatpush2.msra.mxu0 0.0
    %592 = vmatprep.subr.mxu0 0.0
    %593 = vmatpush2.msra.mxu0 0.0
    %594 = vmatprep.subr.mxu0 0.0
    %595 = vmatpush2.msra.mxu0 0.0
    %596 = vmatprep.subr.mxu0 0.0
    %597 = vmatpush2.msra.mxu0 0.0
    %598 = vmatprep.subr.mxu0 0.0
    %599 = vmatpush2.msra.mxu0 0.0
    %600 = vmatprep.subr.mxu0 0.0
    %601 = vmatpush2.msra.mxu0 0.0
    %602 = vmatprep.subr.mxu0 0.0
    %603 = vmatpush2.msra.mxu0 0.0
    %604 = vmatprep.subr.mxu0 0.0
    %605 = vmatpush2.msra.mxu0 0.0
    %606 = vmatprep.subr.mxu0 0.0
    %607 = vmatpush2.msra.mxu0 0.0
    %608 = vmatprep.subr.mxu0 0.0
    %609 = vmatpush2.msra.mxu0 0.0
    %610 = vmatprep.subr.mxu0 0.0
    %611 = vmatpush2.msra.mxu0 0.0
    %612 = vmatprep.mubr.f32.mxu0 0.0
    %613 = vmatmul.mubr.f32.gmra.mxu0 %v313
    %v614 = vpop.f32.mrf.mxu0
    %v615 = vadd.f32 %v544, %v614
    %v616 = vpop.f32.mrf.mxu0
    %v617 = vadd.f32 %v546, %v616
    %618 = vdwg.mxu0
    %619 = vmatprep.subr.mxu0 0.0
    %620 = vmatpush1.msra.mxu0 %v363
    %621 = vmatprep.subr.mxu0 0.0
    %622 = vmatpush1.msra.mxu0 %v360
    %623 = vmatprep.subr.mxu0 0.0
    %624 = vmatpush1.msra.mxu0 %v357
    %625 = vmatprep.subr.mxu0 0.0
    %626 = vmatpush1.msra.mxu0 %v354
    %627 = vmatprep.subr.mxu0 0.0
    %628 = vmatpush1.msra.mxu0 %v351
    %629 = vmatprep.subr.mxu0 0.0
    %630 = vmatpush1.msra.mxu0 %v348
    %631 = vmatprep.subr.mxu0 0.0
    %632 = vmatpush1.msra.mxu0 %v345
    %633 = vmatprep.subr.mxu0 0.0
    %634 = vmatpush1.msra.mxu0 %v342
    %635 = vmatprep.subr.mxu0 0.0
    %636 = vmatpush1.msra.mxu0 %v339
    %637 = vmatprep.subr.mxu0 0.0
    %638 = vmatpush1.msra.mxu0 %v336
    %639 = vmatprep.subr.mxu0 0.0
    %640 = vmatpush1.msra.mxu0 %v333
    %641 = vmatprep.subr.mxu0 0.0
    %642 = vmatpush1.msra.mxu0 %v330
    %643 = vmatprep.subr.mxu0 0.0
    %644 = vmatpush1.msra.mxu0 %v327
    %645 = vmatprep.subr.mxu0 0.0
    %646 = vmatpush1.msra.mxu0 %v324
    %647 = vmatprep.subr.mxu0 0.0
    %648 = vmatpush1.msra.mxu0 %v321
    %649 = vmatprep.subr.mxu0 0.0
    %650 = vmatpush1.msra.mxu0 %v318
    %651 = vmatprep.subr.mxu0 0.0
    %652 = vmatpush2.msra.mxu0 %v411
    %653 = vmatprep.subr.mxu0 0.0
    %654 = vmatpush2.msra.mxu0 %v408
    %655 = vmatprep.subr.mxu0 0.0
    %656 = vmatpush2.msra.mxu0 %v405
    %657 = vmatprep.subr.mxu0 0.0
    %658 = vmatpush2.msra.mxu0 %v402
    %659 = vmatprep.subr.mxu0 0.0
    %660 = vmatpush2.msra.mxu0 %v399
    %661 = vmatprep.subr.mxu0 0.0
    %662 = vmatpush2.msra.mxu0 %v396
    %663 = vmatprep.subr.mxu0 0.0
    %664 = vmatpush2.msra.mxu0 %v393
    %665 = vmatprep.subr.mxu0 0.0
    %666 = vmatpush2.msra.mxu0 %v390
    %667 = vmatprep.subr.mxu0 0.0
    %668 = vmatpush2.msra.mxu0 %v387
    %669 = vmatprep.subr.mxu0 0.0
    %670 = vmatpush2.msra.mxu0 %v384
    %671 = vmatprep.subr.mxu0 0.0
    %672 = vmatpush2.msra.mxu0 %v381
    %673 = vmatprep.subr.mxu0 0.0
    %674 = vmatpush2.msra.mxu0 %v378
    %675 = vmatprep.subr.mxu0 0.0
    %676 = vmatpush2.msra.mxu0 %v375
    %677 = vmatprep.subr.mxu0 0.0
    %678 = vmatpush2.msra.mxu0 %v372
    %679 = vmatprep.subr.mxu0 0.0
    %680 = vmatpush2.msra.mxu0 %v369
    %681 = vmatprep.subr.mxu0 0.0
    %682 = vmatpush2.msra.mxu0 %v366
    %683 = vmatprep.mubr.f32.mxu0 %v244
    %684 = vmatmul.mubr.f32.gmra.mxu0 %v242
    %v685 = vpop.f32.mrf.mxu0
    %v686 = vadd.f32 %v473, %v685
    %v687 = vpop.f32.mrf.mxu0
    %688 = vdwg.mxu0
    %689 = vmatprep.subr.mxu0 0.0
    %690 = vmatpush1.msra.mxu0 %v459
    %691 = vmatprep.subr.mxu0 0.0
    %692 = vmatpush1.msra.mxu0 %v456
    %693 = vmatprep.subr.mxu0 0.0
    %694 = vmatpush1.msra.mxu0 %v453
    %695 = vmatprep.subr.mxu0 0.0
    %696 = vmatpush1.msra.mxu0 %v450
    %697 = vmatprep.subr.mxu0 0.0
    %698 = vmatpush1.msra.mxu0 %v447
    %699 = vmatprep.subr.mxu0 0.0
    %700 = vmatpush1.msra.mxu0 %v444
    %701 = vmatprep.subr.mxu0 0.0
    %702 = vmatpush1.msra.mxu0 %v441
    %703 = vmatprep.subr.mxu0 0.0
    %704 = vmatpush1.msra.mxu0 %v438
    %705 = vmatprep.subr.mxu0 0.0
    %706 = vmatpush1.msra.mxu0 %v435
    %707 = vmatprep.subr.mxu0 0.0
    %708 = vmatpush1.msra.mxu0 %v432
    %709 = vmatprep.subr.mxu0 0.0
    %710 = vmatpush1.msra.mxu0 %v429
    %711 = vmatprep.subr.mxu0 0.0
    %712 = vmatpush1.msra.mxu0 %v426
    %713 = vmatprep.subr.mxu0 0.0
    %714 = vmatpush1.msra.mxu0 %v423
    %715 = vmatprep.subr.mxu0 0.0
    %716 = vmatpush1.msra.mxu0 %v420
    %717 = vmatprep.subr.mxu0 0.0
    %718 = vmatpush1.msra.mxu0 %v417
    %719 = vmatprep.subr.mxu0 0.0
    %720 = vmatpush1.msra.mxu0 %v414
    %721 = vmatprep.subr.mxu0 0.0
    %722 = vmatpush2.msra.mxu0 0.0
    %723 = vmatprep.subr.mxu0 0.0
    %724 = vmatpush2.msra.mxu0 0.0
    %725 = vmatprep.subr.mxu0 0.0
    %726 = vmatpush2.msra.mxu0 0.0
    %727 = vmatprep.subr.mxu0 0.0
    %728 = vmatpush2.msra.mxu0 0.0
    %729 = vmatprep.subr.mxu0 0.0
    %730 = vmatpush2.msra.mxu0 0.0
    %731 = vmatprep.subr.mxu0 0.0
    %732 = vmatpush2.msra.mxu0 0.0
    %733 = vmatprep.subr.mxu0 0.0
    %734 = vmatpush2.msra.mxu0 0.0
    %735 = vmatprep.subr.mxu0 0.0
    %736 = vmatpush2.msra.mxu0 0.0
    %737 = vmatprep.subr.mxu0 0.0
    %738 = vmatpush2.msra.mxu0 0.0
    %739 = vmatprep.subr.mxu0 0.0
    %740 = vmatpush2.msra.mxu0 0.0
    %741 = vmatprep.subr.mxu0 0.0
    %742 = vmatpush2.msra.mxu0 0.0
    %743 = vmatprep.subr.mxu0 0.0
    %744 = vmatpush2.msra.mxu0 0.0
    %745 = vmatprep.subr.mxu0 0.0
    %746 = vmatpush2.msra.mxu0 0.0
    %747 = vmatprep.subr.mxu0 0.0
    %748 = vmatpush2.msra.mxu0 0.0
    %749 = vmatprep.subr.mxu0 0.0
    %750 = vmatpush2.msra.mxu0 0.0
    %751 = vmatprep.subr.mxu0 0.0
    %752 = vmatpush2.msra.mxu0 0.0
    %753 = vmatprep.mubr.f32.mxu0 0.0
    %754 = vmatmul.mubr.f32.gmra.mxu0 %v313
    %v755 = vpop.f32.mrf.mxu0
    %v756 = vadd.f32 %v686, %v755
    %v757 = vpop.f32.mrf.mxu0
    %758 = vdwg.mxu0
    %759 = vst [vmem:[#allocation8] sm:$0xff] %v615
    %760 = vst [vmem:[#allocation8 + $0x8] sm:$0xff] %v617
    %761 = vst [vmem:[#allocation8 + $0x10] sm:$0xff] %v756
    // Predicated region
    $region34: #{tpu_custom_call.1} parent=1 // pred_check
      _
    $region35: #{tpu_custom_call.1} parent=1 // pred_check_branch
      %763 = sbr.rel (0) target = $region37
    $region36: #{tpu_custom_call.1} parent=1 // pred_region
      %s765 = ssub.s32 384, 384
      %766 = vsyncadd [#allocation4], %s765
      %s768 = sshll.u32 [#allocation8], 4
      %s769 = int_to_ptr.vmem [resolvable:$true] %s768
      %771 = dma.vmem_to_hbm [thread:$0]  %s769, 384, %s5, [#allocation4]
    $region37: #{tpu_custom_call.1} parent=1 // pred_fallthru
      _
    // Predicated region
    $region38: #{tpu_custom_call.1} parent=1 // pred_check
      _
    $region39: #{tpu_custom_call.1} parent=1 // pred_check_branch
      %773 = sbr.rel (0) target = $region41
    $region40: #{tpu_custom_call.1} parent=1 // pred_region
      %774 = dma.done [#allocation4], 384
    $region41: #{tpu_custom_call.1} parent=1 // pred_fallthru
      _
    %775 = vsyncpa [#allocation3], 1
    %776 = vsyncpa [#allocation6], 1
    %777 = vsyncpa [#allocation4], 1

</llo_original>
